<compile_context>
chip_gen: v7x
topology: tpu7x:2x2x1
jax: 0.10.0
libtpu: 0.0.40
codegen_flags: <defaults>
</compile_context>

<pallas_src>
import math

import jax
import jax.numpy as jnp
from jax.experimental import pallas as pl
from jax.experimental.pallas import tpu as pltpu

_LANE = 128
_SUBLANE = 8


def _round_up(x, m):
    return (x + m - 1) // m * m


def _tpu_vmem_capacity_bytes():
    try:
        return int(pltpu.get_tpu_info().vmem_capacity_bytes)
    except Exception:
        return 64 << 20  # conservative (v7x-sized) fallback


def _generation_params():
    """Returns (working-set budget, default batch tile, split-M hint, vmem clamp)."""
    cap = _tpu_vmem_capacity_bytes()
    if cap >= (128 << 20):          # v5e / v6e: 128 MiB VMEM per core
        budget = 96 << 20
        block_m = 1024
        split_m = False
    else:                           # v7x-class: 64 MiB per TC, 2 TCs per chip
        budget = 48 << 20
        block_m = 512
        split_m = True
    vmem_clamp = cap - (8 << 20)    # leave headroom for compiler internal scratch
    return budget, block_m, split_m, vmem_clamp


def _linear_kernel(x_ref, w_ref, b_ref, y_ref):
    # y = x @ w + b for one (batch-tile, class-tile) block.
    # x arrives f32 straight from HBM; cast to the weight dtype (bf16) on the
    # VPU so the wrapper never round-trips a casted copy of x through HBM.
    x = x_ref[...].astype(w_ref.dtype)
    acc = jnp.dot(x, w_ref[...], preferred_element_type=jnp.float32)
    y_ref[...] = (acc + b_ref[...]).astype(y_ref.dtype)


def prepare_classifier_params(w_t, b, *, compute_dtype=jnp.bfloat16):
    """One-time prep of the constant Linear params (cache the result across calls).

    w_t : [F, C] float32  (PyTorch fc.weight.T)
    b   : [C] or [1, C] float32  (PyTorch fc.bias)
    """
    F, C = w_t.shape
    budget, _, _, _ = _generation_params()
    itemsize = jnp.dtype(compute_dtype).itemsize

    # Class tile: whole lane-padded class dim if that weight slab fits half the
    # VMEM budget, otherwise the largest lane-multiple slab that does.
    c_lane = _round_up(C, _LANE)
    weight_budget = budget // 2
    if F * c_lane * itemsize <= weight_budget:
        tn = c_lane
    else:
        tn = max((weight_budget // (F * itemsize)) // _LANE * _LANE, _LANE)
    c_pad = _round_up(C, tn)

    w_c = w_t.astype(compute_dtype)
    b_f = jnp.asarray(b, jnp.float32).reshape(1, C)
    if c_pad != C:
        w_c = jnp.pad(w_c, ((0, 0), (0, c_pad - C)))
        b_f = jnp.pad(b_f, ((0, 0), (0, c_pad - C)))
    return {"w": w_c, "b": b_f, "class_num": C, "tn": tn}


def classifier_wobot_forward(x, params):
    """Pallas equivalent of Classifierwobot.forward: returns (x, fc(x))."""
    w_c, b_f = params["w"], params["b"]
    C, tn = params["class_num"], params["tn"]
    B, F = x.shape
    Fw, C_p = w_c.shape
    assert Fw == F and C_p % tn == 0
    n_tiles = C_p // tn

    budget, block_m, split_m, vmem_clamp = _generation_params()
    out_dtype = x.dtype
    x_item = jnp.dtype(x.dtype).itemsize
    w_item = jnp.dtype(w_c.dtype).itemsize
    out_item = jnp.dtype(out_dtype).itemsize
    w_bufs = 1 if n_tiles == 1 else 2   # resident slab vs streamed slabs

    def vmem_bytes(tm):
        return (2 * tm * F * x_item          # x tiles (double-buffered, f32)
                + tm * F * w_item            # in-kernel bf16 cast of the x tile
                + w_bufs * F * tn * w_item   # weight slab buffer(s)
                + w_bufs * tn * 4            # bias buffer(s)
                + 2 * tm * tn * out_item     # y tiles (double-buffered)
                + tm * tn * 4)               # f32 matmul/add temporary

    # Batch tile: multiple of 8 sublanes; on v7x keep >=2 grid steps so the
    # "parallel" batch axis can actually be split across the 2 TensorCores.
    tm = max(min(_round_up(B, _SUBLANE), _round_up(block_m, _SUBLANE)), _SUBLANE)
    if split_m and B >= 256:
        tm = min(tm, _round_up(pl.cdiv(B, 2), _SUBLANE))
    while tm > _SUBLANE and vmem_bytes(tm) > budget:
        tm = max(_round_up(tm // 2, _SUBLANE), _SUBLANE)
    m_tiles = pl.cdiv(B, tm)

    cost = pl.CostEstimate(
        flops=2 * B * F * C_p,
        transcendentals=0,
        bytes_accessed=int(x_item * B * F + w_item * F * C_p
                           + 4 * C_p + out_item * B * C_p),
    )
    vmem_limit = int(min(max(vmem_bytes(tm) + (8 << 20), 32 << 20), vmem_clamp))

    def call(const_kw):
        return pl.pallas_call(
            _linear_kernel,
            out_shape=jax.ShapeDtypeStruct((B, C_p), out_dtype),
            grid=(m_tiles, n_tiles),
            in_specs=[
                pl.BlockSpec((tm, F), lambda i, j: (i, 0)),              # x: batch-streamed
                pl.BlockSpec((F, tn), lambda i, j: (0, j), **const_kw),  # weight slab
                pl.BlockSpec((1, tn), lambda i, j: (0, j), **const_kw),  # bias
            ],
            out_specs=pl.BlockSpec((tm, tn), lambda i, j: (i, j)),
            compiler_params=pltpu.CompilerParams(
                dimension_semantics=("parallel", "parallel"),
                vmem_limit_bytes=vmem_limit,
            ),
            cost_estimate=cost,
        )(x, w_c, b_f)

    if n_tiles == 1:
        # Constant index_map -> a single resident buffer is enough.
        try:
            y_pad = call({"pipeline_mode": pl.Buffered(1)})
        except Exception:  # pragma: no cover - Pallas build without Buffered(1)
            y_pad = call({})
    else:
        y_pad = call({})

    # TODO(synk): add a feature (K) grid axis with an f32 VMEM accumulator if
    # feature_dim ever grows so large that even an (F, 128) weight slab plus the
    # x tile cannot fit VMEM; classifier heads do not hit this in practice.
    y = y_pad if C_p == C else y_pad[:, :C]
    # Module returns the input unchanged as the first element.
    return x, y


def init_classifier_params(key, class_num, feature_dim):
    """xavier_normal_ weight + zero bias (matches init_weights for nn.Linear)."""
    std = math.sqrt(2.0 / (feature_dim + class_num))
    w = jax.random.normal(key, (class_num, feature_dim), dtype=jnp.float32) * std
    b = jnp.zeros((class_num,), dtype=jnp.float32)
    # Store transposed so y = x @ w_t + b is lane-dense in the class dim.
    return w.T, b


if __name__ == "__main__":
    key = jax.random.PRNGKey(0)
    k_x, k_w = jax.random.split(key)

    batch = 8
    feature_dim = 32
    class_num = 16

    x = jax.random.normal(k_x, (batch, feature_dim), dtype=jnp.float32)
    w_t, b = init_classifier_params(k_w, class_num, feature_dim)

    params = prepare_classifier_params(w_t, b)       # one-time; cache across calls
    x_out, y_out = classifier_wobot_forward(x, params)
    jax.block_until_ready((x_out, y_out))

    # Reference: same bf16-operand / f32-accumulate contraction, plus a looser
    # check against the full f32 product (bf16 operands are not bit-identical
    # to the fp32 PyTorch nn.Linear).
    y_bf16_ref = jnp.dot(x.astype(jnp.bfloat16), w_t.astype(jnp.bfloat16),
                         preferred_element_type=jnp.float32) + b.reshape(1, -1)
    y_f32_ref = x @ w_t + b.reshape(1, -1)

    assert x_out.shape == (batch, feature_dim)
    assert y_out.shape == (batch, class_num)
    assert jnp.array_equal(x_out, x)
    assert jnp.allclose(y_out, y_bf16_ref, atol=2e-3, rtol=2e-3)
    assert jnp.allclose(y_out, y_f32_ref, atol=5e-2, rtol=5e-2)

    print("KERNEL_OK")
</pallas_src>

<mosaic_0001>
module attributes {stable_mosaic.version = 11 : i64} {
  func.func @_linear_kernel(%arg0: i32, %arg1: i32, %arg2: memref<8x32xf32, #tpu.memory_space<vmem>>, %arg3: memref<32x128xbf16, #tpu.memory_space<vmem>>, %arg4: memref<1x128xf32, #tpu.memory_space<vmem>>, %arg5: memref<8x128xf32, #tpu.memory_space<vmem>>) attributes {dimension_semantics = [#tpu.dimension_semantics<parallel>, #tpu.dimension_semantics<parallel>], iteration_bounds = array<i64: 1, 1>, scalar_prefetch = 0 : i64, scratch_operands = 0 : i64, tpu.core_type = #tpu.core_type<tc>, window_params = [{transform_indices = @transform_0, window_bounds = array<i64: 8, 32>}, {pipeline_mode = #tpu.pipeline_mode<synchronous>, transform_indices = @transform_1, window_bounds = array<i64: 32, 128>}, {pipeline_mode = #tpu.pipeline_mode<synchronous>, transform_indices = @transform_2, window_bounds = array<i64: 1, 128>}, {transform_indices = @transform_3, window_bounds = array<i64: 8, 128>}]} {
    %c0 = arith.constant 0 : index
    %c0_0 = arith.constant 0 : index
    %0 = vector.load %arg2[%c0, %c0_0] : memref<8x32xf32, #tpu.memory_space<vmem>>, vector<8x32xf32>
    %1 = arith.truncf %0 : vector<8x32xf32> to vector<8x32xbf16>
    %c0_1 = arith.constant 0 : index
    %c0_2 = arith.constant 0 : index
    %2 = vector.load %arg3[%c0_1, %c0_2] : memref<32x128xbf16, #tpu.memory_space<vmem>>, vector<32x128xbf16>
    %cst = arith.constant dense<0.000000e+00> : vector<8x128xf32>
    %3 = tpu.matmul %1, %2, %cst {dimension_numbers = #tpu.dot_dimension_numbers<[1], [0], [0], [1], [0, 0, 1, 1], [], []>} : vector<8x32xbf16>, vector<32x128xbf16>, vector<8x128xf32> -> vector<8x128xf32>
    %c0_3 = arith.constant 0 : index
    %c0_4 = arith.constant 0 : index
    %4 = vector.load %arg4[%c0_3, %c0_4] : memref<1x128xf32, #tpu.memory_space<vmem>>, vector<1x128xf32>
    %5 = vector.broadcast %4 : vector<1x128xf32> to vector<8x128xf32>
    %6 = arith.addf %3, %5 : vector<8x128xf32>
    %c0_5 = arith.constant 0 : index
    %c0_6 = arith.constant 0 : index
    %7 = vector.load %arg5[%c0_5, %c0_6] : memref<8x128xf32, #tpu.memory_space<vmem>>, vector<8x128xf32>
    tpu.vector_store %arg5[%c0_5, %c0_6], %6 {strides = array<i32>} : memref<8x128xf32, #tpu.memory_space<vmem>>, vector<8x128xf32>,
    return
  }
  func.func @transform_0(%arg0: i32, %arg1: i32) -> (i32, i32) {
    %c0_i32 = arith.constant 0 : i32
    %c0_i32_0 = arith.constant 0 : i32
    return %arg0, %c0_i32 : i32, i32
  }
  func.func @transform_1(%arg0: i32, %arg1: i32) -> (i32, i32) {
    %c0_i32 = arith.constant 0 : i32
    %c0_i32_0 = arith.constant 0 : i32
    return %c0_i32, %arg1 : i32, i32
  }
  func.func @transform_2(%arg0: i32, %arg1: i32) -> (i32, i32) {
    %c0_i32 = arith.constant 0 : i32
    %c0_i32_0 = arith.constant 0 : i32
    return %c0_i32, %arg1 : i32, i32
  }
  func.func @transform_3(%arg0: i32, %arg1: i32) -> (i32, i32) {
    %c0_i32 = arith.constant 0 : i32
    return %arg0, %arg1 : i32, i32
  }
}

module attributes {stable_mosaic.version = 11 : i64} {
  func.func @_linear_kernel(%arg0: i32, %arg1: i32, %arg2: memref<8x32xf32, #tpu.memory_space<vmem>>, %arg3: memref<32x128xbf16, #tpu.memory_space<vmem>>, %arg4: memref<1x128xf32, #tpu.memory_space<vmem>>, %arg5: memref<8x128xf32, #tpu.memory_space<vmem>>) attributes {dimension_semantics = [#tpu.dimension_semantics<parallel>, #tpu.dimension_semantics<parallel>], iteration_bounds = array<i64: 1, 1>, scalar_prefetch = 0 : i64, scratch_operands = 0 : i64, tpu.core_type = #tpu.core_type<tc>, window_params = [{transform_indices = @transform_0, window_bounds = array<i64: 8, 32>}, {transform_indices = @transform_1, window_bounds = array<i64: 32, 128>}, {transform_indices = @transform_2, window_bounds = array<i64: 1, 128>}, {transform_indices = @transform_3, window_bounds = array<i64: 8, 128>}]} {
    %c0 = arith.constant 0 : index
    %c0_0 = arith.constant 0 : index
    %0 = vector.load %arg2[%c0, %c0_0] : memref<8x32xf32, #tpu.memory_space<vmem>>, vector<8x32xf32>
    %1 = arith.truncf %0 : vector<8x32xf32> to vector<8x32xbf16>
    %c0_1 = arith.constant 0 : index
    %c0_2 = arith.constant 0 : index
    %2 = vector.load %arg3[%c0_1, %c0_2] : memref<32x128xbf16, #tpu.memory_space<vmem>>, vector<32x128xbf16>
    %cst = arith.constant dense<0.000000e+00> : vector<8x128xf32>
    %3 = tpu.matmul %1, %2, %cst {dimension_numbers = #tpu.dot_dimension_numbers<[1], [0], [0], [1], [0, 0, 1, 1], [], []>} : vector<8x32xbf16>, vector<32x128xbf16>, vector<8x128xf32> -> vector<8x128xf32>
    %c0_3 = arith.constant 0 : index
    %c0_4 = arith.constant 0 : index
    %4 = vector.load %arg4[%c0_3, %c0_4] : memref<1x128xf32, #tpu.memory_space<vmem>>, vector<1x128xf32>
    %5 = vector.broadcast %4 : vector<1x128xf32> to vector<8x128xf32>
    %6 = arith.addf %3, %5 : vector<8x128xf32>
    %c0_5 = arith.constant 0 : index
    %c0_6 = arith.constant 0 : index
    %7 = vector.load %arg5[%c0_5, %c0_6] : memref<8x128xf32, #tpu.memory_space<vmem>>, vector<8x128xf32>
    tpu.vector_store %arg5[%c0_5, %c0_6], %6 {strides = array<i32>} : memref<8x128xf32, #tpu.memory_space<vmem>>, vector<8x128xf32>,
    return
  }
  func.func @transform_0(%arg0: i32, %arg1: i32) -> (i32, i32) {
    %c0_i32 = arith.constant 0 : i32
    %c0_i32_0 = arith.constant 0 : i32
    return %arg0, %c0_i32 : i32, i32
  }
  func.func @transform_1(%arg0: i32, %arg1: i32) -> (i32, i32) {
    %c0_i32 = arith.constant 0 : i32
    %c0_i32_0 = arith.constant 0 : i32
    return %c0_i32, %arg1 : i32, i32
  }
  func.func @transform_2(%arg0: i32, %arg1: i32) -> (i32, i32) {
    %c0_i32 = arith.constant 0 : i32
    %c0_i32_0 = arith.constant 0 : i32
    return %c0_i32, %arg1 : i32, i32
  }
  func.func @transform_3(%arg0: i32, %arg1: i32) -> (i32, i32) {
    %c0_i32 = arith.constant 0 : i32
    return %arg0, %arg1 : i32, i32
  }
}

</mosaic_0001>

<llo_original>
// kernel: tpu_custom_call.1
$region0: #{tpu_custom_call.1}
  #allocation0 [shape = 'u32[]', space=smem, size = 0x4, offset = 0x4, fixed_abs, tag = 'smem constant byte address 0x4 - core index']
  #allocation1 [shape = 'u32[144,128]{1,0:T(1,128)}', space=vmem, size = 0x12000, scoped, tag = 'internal scratch']
  %s0 = inlined_call_operand.hbm [shape: f32[8,32], index: 0, kind: input, shape index: {}]
  %s1 = inlined_call_operand.hbm [shape: bf16[32,128], index: 1, kind: input, shape index: {}]
  %s2 = inlined_call_operand.vmem [shape: f32[1,128], index: 2, kind: input, shape index: {}]
  %s3 = inlined_call_operand.hbm [shape: f32[8,128], index: 3, kind: output, shape index: {}]
  %s4 = sld [smem:[#allocation0]]
  $region30: #{tpu_custom_call.1} parent=0
    _
  %s6 = ssub.s32 1, %s4
  %s7 = scalar_select 0, %s6, %s4
  $region1: #{tpu_custom_call.1} parent=0
    #allocation2 [shape = 'u8[4096]{0}', space=vmem, size = 0x1000, scoped, tag = 'input window, operand 0, single buffered']
    #allocation3 [shape = 's32[1]{0}', space=sflag, size = 0x4, scoped, tag = 'scoped memory for tpu_custom_call.1']
    #allocation4 [shape = 's32[1]{0}', space=sflag, size = 0x4, scoped, tag = 'scoped memory for tpu_custom_call.1']
    #allocation5 [shape = 'u8[8192]{0}', space=vmem, size = 0x2000, scoped, tag = 'input window, operand 1, single buffered']
    #allocation6 [shape = 's32[1]{0}', space=sflag, size = 0x4, scoped, tag = 'scoped memory for tpu_custom_call.1']
    #allocation7 [shape = 'u8[4096]{0}', space=vmem, size = 0x1000, scoped, tag = 'output window, operand 0, single buffered']
    %8 = vsyncpa [#allocation3], 0
    %9 = vsyncpa [#allocation6], 0
    %10 = vsyncpa [#allocation4], 0
    // Predicated region
    $region2: #{tpu_custom_call.1} parent=1 // pred_check
      _
    $region3: #{tpu_custom_call.1} parent=1 // pred_check_branch
      %12 = sbr.rel (0) target = $region5
    $region4: #{tpu_custom_call.1} parent=1 // pred_region
      %s14 = ssub.s32 128, 128
      %15 = vsyncadd [#allocation3], %s14
      %s17 = sshll.u32 [#allocation2], 4
      %s18 = int_to_ptr.vmem [resolvable:$true] %s17
      %20 = dma.hbm_to_vmem [thread:$0]  %s0, 128, %s18, [#allocation3]
    $region5: #{tpu_custom_call.1} parent=1 // pred_fallthru
      _
    // Predicated region
    $region6: #{tpu_custom_call.1} parent=1 // pred_check
      _
    $region7: #{tpu_custom_call.1} parent=1 // pred_check_branch
      %22 = sbr.rel (0) target = $region9
    $region8: #{tpu_custom_call.1} parent=1 // pred_region
      %s24 = ssub.s32 256, 256
      %25 = vsyncadd [#allocation6], %s24
      %s26 = sshll.u32 [#allocation5], 4
      %s27 = int_to_ptr.vmem [resolvable:$true] %s26
      %32 = dma.hbm_to_vmem [thread:$0]  %s1, 256, %s27, [#allocation6], 64, 64, 4
    $region9: #{tpu_custom_call.1} parent=1 // pred_fallthru
      _
    // Predicated region
    $region10: #{tpu_custom_call.1} parent=1 // pred_check
      _
    $region11: #{tpu_custom_call.1} parent=1 // pred_check_branch
      %34 = sbr.rel (0) target = $region13
    $region12: #{tpu_custom_call.1} parent=1 // pred_region
      _
    $region13: #{tpu_custom_call.1} parent=1 // pred_fallthru
      _
    // Predicated region
    $region14: #{tpu_custom_call.1} parent=1 // pred_check
      _
    $region15: #{tpu_custom_call.1} parent=1 // pred_check_branch
      %36 = sbr.rel (0) target = $region17
    $region16: #{tpu_custom_call.1} parent=1 // pred_region
      %37 = dma.done [#allocation3], 128
    $region17: #{tpu_custom_call.1} parent=1 // pred_fallthru
      _
    // Predicated region
    $region18: #{tpu_custom_call.1} parent=1 // pred_check
      _
    $region19: #{tpu_custom_call.1} parent=1 // pred_check_branch
      %39 = sbr.rel (0) target = $region21
    $region20: #{tpu_custom_call.1} parent=1 // pred_region
      %40 = dma.done [#allocation6], 256
    $region21: #{tpu_custom_call.1} parent=1 // pred_fallthru
      _
    %v42 = vld [vmem:[#allocation2] sm:$0xff]
    %v43 = vpack.c.bf16 %v42, %v42
    %v44 = vld [vmem:[#allocation5] sm:$0xf]
    %v45 = vld [vmem:[#allocation5 + $0x4] sm:$0xf]
    %v46 = vld [vmem:[#allocation5 + $0x8] sm:$0xf]
    %v47 = vld [vmem:[#allocation5 + $0xc] sm:$0xf]
    %v48 = vld [vmem:[%s2] sm:$0x1]
    %v50 = vlaneseq
    %v51 = vshrl.u32 %v50, 7
    %v52 = vsub.s32 0, %v51
    %v53 = vrot.slane %v48, %v52
    %v59 = vunpack.c.l.b16 %v44
    %v60 = vunpack.c.l.b16 %v45
    %v61 = vunpack.c.l.b16 %v46
    %v62 = vunpack.c.l.b16 %v47
    %v63 = vpack.c.b16 %v60, %v59
    %v64 = vpack.c.b16 %v62, %v61
    %vm67 = vcmask 261120
    %v69 = vsel %vm67, %v43, 0
    %71 = vmatprep.subr.bf16.mxu0 0
    %72 = vmatpush1.bf16.msra.mxu0 %v63
    %73 = vmatprep.subr.bf16.mxu0 0
    %74 = vmatpush1.bf16.msra.mxu0 %v64
    %75 = vmatprep.subr.bf16.mxu0 0
    %76 = vmatpush1.bf16.msra.mxu0 0
    %77 = vmatprep.subr.bf16.mxu0 0
    %78 = vmatpush1.bf16.msra.mxu0 0
    %79 = vmatprep.subr.bf16.mxu0 0
    %80 = vmatpush1.bf16.msra.mxu0 0
    %81 = vmatprep.subr.bf16.mxu0 0
    %82 = vmatpush1.bf16.msra.mxu0 0
    %83 = vmatprep.subr.bf16.mxu0 0
    %84 = vmatpush1.bf16.msra.mxu0 0
    %85 = vmatprep.subr.bf16.mxu0 0
    %86 = vmatpush1.bf16.msra.mxu0 0
    %87 = vmatprep.subr.bf16.mxu0 0
    %88 = vmatpush1.bf16.msra.mxu0 0
    %89 = vmatprep.subr.bf16.mxu0 0
    %90 = vmatpush1.bf16.msra.mxu0 0
    %91 = vmatprep.subr.bf16.mxu0 0
    %92 = vmatpush1.bf16.msra.mxu0 0
    %93 = vmatprep.subr.bf16.mxu0 0
    %94 = vmatpush1.bf16.msra.mxu0 0
    %95 = vmatprep.subr.bf16.mxu0 0
    %96 = vmatpush1.bf16.msra.mxu0 0
    %97 = vmatprep.subr.bf16.mxu0 0
    %98 = vmatpush1.bf16.msra.mxu0 0
    %99 = vmatprep.subr.bf16.mxu0 0
    %100 = vmatpush1.bf16.msra.mxu0 0
    %101 = vmatprep.subr.bf16.mxu0 0
    %102 = vmatpush1.bf16.msra.mxu0 0
    %103 = vmatprep.mubr.bf16.mxu0 0
    %104 = vmatmul.mubr.bf16.gmra.mrb[0].mxu0 %v69
    %v105 = vpop.f32.mrb[0].mxu0
    %v106 = vadd.f32 %v53, %v105
    %v107 = vpop.f32.mrb[0].mxu0
    %v108 = vpop.f32.mrb[0].mxu0
    %v109 = vpop.f32.mrb[0].mxu0
    %110 = vdwg.mxu0
    %111 = vst [vmem:[#allocation7] sm:$0xff] %v106
    // Predicated region
    $region22: #{tpu_custom_call.1} parent=1 // pred_check
      _
    $region23: #{tpu_custom_call.1} parent=1 // pred_check_branch
      %113 = sbr.rel (0) target = $region25
    $region24: #{tpu_custom_call.1} parent=1 // pred_region
      %s115 = ssub.s32 128, 128
      %116 = vsyncadd [#allocation4], %s115
      %s118 = sshll.u32 [#allocation7], 4
      %s119 = int_to_ptr.vmem [resolvable:$true] %s118
      %121 = dma.vmem_to_hbm [thread:$0]  %s119, 128, %s3, [#allocation4]
    $region25: #{tpu_custom_call.1} parent=1 // pred_fallthru
      _
    // Predicated region
    $region26: #{tpu_custom_call.1} parent=1 // pred_check
      _
    $region27: #{tpu_custom_call.1} parent=1 // pred_check_branch
      %123 = sbr.rel (0) target = $region29
    $region28: #{tpu_custom_call.1} parent=1 // pred_region
      %124 = dma.done [#allocation4], 128
    $region29: #{tpu_custom_call.1} parent=1 // pred_fallthru
      _
    %125 = vsyncpa [#allocation3], 1
    %126 = vsyncpa [#allocation6], 1
    %127 = vsyncpa [#allocation4], 1

// kernel: tpu_custom_call.1
$region0: #{tpu_custom_call.1}
  #allocation0 [shape = 'u32[]', space=smem, size = 0x4, offset = 0x4, fixed_abs, tag = 'smem constant byte address 0x4 - core index']
  #allocation1 [shape = 'u32[144,128]{1,0:T(1,128)}', space=vmem, size = 0x12000, scoped, tag = 'internal scratch']
  %s0 = inlined_call_operand.hbm [shape: f32[8,32], index: 0, kind: input, shape index: {}]
  %s1 = inlined_call_operand.hbm [shape: bf16[32,128], index: 1, kind: input, shape index: {}]
  %s2 = inlined_call_operand.vmem [shape: f32[1,128], index: 2, kind: input, shape index: {}]
  %s3 = inlined_call_operand.hbm [shape: f32[8,128], index: 3, kind: output, shape index: {}]
  %s4 = sld [smem:[#allocation0]]
  $region30: #{tpu_custom_call.1} parent=0
    _
  %s6 = ssub.s32 1, %s4
  %s7 = scalar_select 0, %s6, %s4
  $region1: #{tpu_custom_call.1} parent=0
    #allocation2 [shape = 'u8[4096]{0}', space=vmem, size = 0x1000, scoped, tag = 'input window, operand 0, single buffered']
    #allocation3 [shape = 's32[1]{0}', space=sflag, size = 0x4, scoped, tag = 'scoped memory for tpu_custom_call.1']
    #allocation4 [shape = 's32[1]{0}', space=sflag, size = 0x4, scoped, tag = 'scoped memory for tpu_custom_call.1']
    #allocation5 [shape = 'u8[8192]{0}', space=vmem, size = 0x2000, scoped, tag = 'input window, operand 1, single buffered']
    #allocation6 [shape = 's32[1]{0}', space=sflag, size = 0x4, scoped, tag = 'scoped memory for tpu_custom_call.1']
    #allocation7 [shape = 'u8[4096]{0}', space=vmem, size = 0x1000, scoped, tag = 'output window, operand 0, single buffered']
    %8 = vsyncpa [#allocation3], 0
    %9 = vsyncpa [#allocation6], 0
    %10 = vsyncpa [#allocation4], 0
    // Predicated region
    $region2: #{tpu_custom_call.1} parent=1 // pred_check
      _
    $region3: #{tpu_custom_call.1} parent=1 // pred_check_branch
      %12 = sbr.rel (0) target = $region5
    $region4: #{tpu_custom_call.1} parent=1 // pred_region
      %s14 = ssub.s32 128, 128
      %15 = vsyncadd [#allocation3], %s14
      %s17 = sshll.u32 [#allocation2], 4
      %s18 = int_to_ptr.vmem [resolvable:$true] %s17
      %20 = dma.hbm_to_vmem [thread:$0]  %s0, 128, %s18, [#allocation3]
    $region5: #{tpu_custom_call.1} parent=1 // pred_fallthru
      _
    // Predicated region
    $region6: #{tpu_custom_call.1} parent=1 // pred_check
      _
    $region7: #{tpu_custom_call.1} parent=1 // pred_check_branch
      %22 = sbr.rel (0) target = $region9
    $region8: #{tpu_custom_call.1} parent=1 // pred_region
      %s24 = ssub.s32 256, 256
      %25 = vsyncadd [#allocation6], %s24
      %s26 = sshll.u32 [#allocation5], 4
      %s27 = int_to_ptr.vmem [resolvable:$true] %s26
      %32 = dma.hbm_to_vmem [thread:$0]  %s1, 256, %s27, [#allocation6], 64, 64, 4
    $region9: #{tpu_custom_call.1} parent=1 // pred_fallthru
      _
    // Predicated region
    $region10: #{tpu_custom_call.1} parent=1 // pred_check
      _
    $region11: #{tpu_custom_call.1} parent=1 // pred_check_branch
      %34 = sbr.rel (0) target = $region13
    $region12: #{tpu_custom_call.1} parent=1 // pred_region
      _
    $region13: #{tpu_custom_call.1} parent=1 // pred_fallthru
      _
    // Predicated region
    $region14: #{tpu_custom_call.1} parent=1 // pred_check
      _
    $region15: #{tpu_custom_call.1} parent=1 // pred_check_branch
      %36 = sbr.rel (0) target = $region17
    $region16: #{tpu_custom_call.1} parent=1 // pred_region
      %37 = dma.done [#allocation3], 128
    $region17: #{tpu_custom_call.1} parent=1 // pred_fallthru
      _
    // Predicated region
    $region18: #{tpu_custom_call.1} parent=1 // pred_check
      _
    $region19: #{tpu_custom_call.1} parent=1 // pred_check_branch
      %39 = sbr.rel (0) target = $region21
    $region20: #{tpu_custom_call.1} parent=1 // pred_region
      %40 = dma.done [#allocation6], 256
    $region21: #{tpu_custom_call.1} parent=1 // pred_fallthru
      _
    %v42 = vld [vmem:[#allocation2] sm:$0xff]
    %v43 = vpack.c.bf16 %v42, %v42
    %v44 = vld [vmem:[#allocation5] sm:$0xf]
    %v45 = vld [vmem:[#allocation5 + $0x4] sm:$0xf]
    %v46 = vld [vmem:[#allocation5 + $0x8] sm:$0xf]
    %v47 = vld [vmem:[#allocation5 + $0xc] sm:$0xf]
    %v48 = vld [vmem:[%s2] sm:$0x1]
    %v50 = vlaneseq
    %v51 = vshrl.u32 %v50, 7
    %v52 = vsub.s32 0, %v51
    %v53 = vrot.slane %v48, %v52
    %v59 = vunpack.c.l.b16 %v44
    %v60 = vunpack.c.l.b16 %v45
    %v61 = vunpack.c.l.b16 %v46
    %v62 = vunpack.c.l.b16 %v47
    %v63 = vpack.c.b16 %v60, %v59
    %v64 = vpack.c.b16 %v62, %v61
    %vm67 = vcmask 261120
    %v69 = vsel %vm67, %v43, 0
    %71 = vmatprep.subr.bf16.mxu0 0
    %72 = vmatpush1.bf16.msra.mxu0 %v63
    %73 = vmatprep.subr.bf16.mxu0 0
    %74 = vmatpush1.bf16.msra.mxu0 %v64
    %75 = vmatprep.subr.bf16.mxu0 0
    %76 = vmatpush1.bf16.msra.mxu0 0
    %77 = vmatprep.subr.bf16.mxu0 0
    %78 = vmatpush1.bf16.msra.mxu0 0
    %79 = vmatprep.subr.bf16.mxu0 0
    %80 = vmatpush1.bf16.msra.mxu0 0
    %81 = vmatprep.subr.bf16.mxu0 0
    %82 = vmatpush1.bf16.msra.mxu0 0
    %83 = vmatprep.subr.bf16.mxu0 0
    %84 = vmatpush1.bf16.msra.mxu0 0
    %85 = vmatprep.subr.bf16.mxu0 0
    %86 = vmatpush1.bf16.msra.mxu0 0
    %87 = vmatprep.subr.bf16.mxu0 0
    %88 = vmatpush1.bf16.msra.mxu0 0
    %89 = vmatprep.subr.bf16.mxu0 0
    %90 = vmatpush1.bf16.msra.mxu0 0
    %91 = vmatprep.subr.bf16.mxu0 0
    %92 = vmatpush1.bf16.msra.mxu0 0
    %93 = vmatprep.subr.bf16.mxu0 0
    %94 = vmatpush1.bf16.msra.mxu0 0
    %95 = vmatprep.subr.bf16.mxu0 0
    %96 = vmatpush1.bf16.msra.mxu0 0
    %97 = vmatprep.subr.bf16.mxu0 0
    %98 = vmatpush1.bf16.msra.mxu0 0
    %99 = vmatprep.subr.bf16.mxu0 0
    %100 = vmatpush1.bf16.msra.mxu0 0
    %101 = vmatprep.subr.bf16.mxu0 0
    %102 = vmatpush1.bf16.msra.mxu0 0
    %103 = vmatprep.mubr.bf16.mxu0 0
    %104 = vmatmul.mubr.bf16.gmra.mrb[0].mxu0 %v69
    %v105 = vpop.f32.mrb[0].mxu0
    %v106 = vadd.f32 %v53, %v105
    %v107 = vpop.f32.mrb[0].mxu0
    %v108 = vpop.f32.mrb[0].mxu0
    %v109 = vpop.f32.mrb[0].mxu0
    %110 = vdwg.mxu0
    %111 = vst [vmem:[#allocation7] sm:$0xff] %v106
    // Predicated region
    $region22: #{tpu_custom_call.1} parent=1 // pred_check
      _
    $region23: #{tpu_custom_call.1} parent=1 // pred_check_branch
      %113 = sbr.rel (0) target = $region25
    $region24: #{tpu_custom_call.1} parent=1 // pred_region
      %s115 = ssub.s32 128, 128
      %116 = vsyncadd [#allocation4], %s115
      %s118 = sshll.u32 [#allocation7], 4
      %s119 = int_to_ptr.vmem [resolvable:$true] %s118
      %121 = dma.vmem_to_hbm [thread:$0]  %s119, 128, %s3, [#allocation4]
    $region25: #{tpu_custom_call.1} parent=1 // pred_fallthru
      _
    // Predicated region
    $region26: #{tpu_custom_call.1} parent=1 // pred_check
      _
    $region27: #{tpu_custom_call.1} parent=1 // pred_check_branch
      %123 = sbr.rel (0) target = $region29
    $region28: #{tpu_custom_call.1} parent=1 // pred_region
      %124 = dma.done [#allocation4], 128
    $region29: #{tpu_custom_call.1} parent=1 // pred_fallthru
      _
    %125 = vsyncpa [#allocation3], 1
    %126 = vsyncpa [#allocation6], 1
    %127 = vsyncpa [#allocation4], 1

</llo_original>
